<compile_context>
chip_gen: v6e
topology: v6e:2x2x1
jax: 0.10.0
libtpu: 0.0.40
codegen_flags: <defaults>
</compile_context>

<pallas_src>
import functools

import jax
import jax.numpy as jnp
from jax import lax
from jax.experimental import pallas as pl
from jax.experimental.pallas import tpu as pltpu


def _adaptive_norm_kernel(x_ref, o_ref, *, alpha: float, l_true: int,
                          lane_masked: bool):
    x = x_ref[...].astype(jnp.float32)              # (TB, Lp)
    _, Lp = x.shape

    lane = lax.broadcasted_iota(jnp.int32, (1, Lp), 1)   # (1, Lp)
    if lane_masked:
        valid = lane < l_true

    # ---- row statistics (PyTorch: mean / unbiased std over dim=2) ----------
    # One pass over the tile, centered on a per-row pivot (the first sample)
    # so the sumsq - sum*mean form does not catastrophically cancel when the
    # spectrum mean >> std.
    pivot = x[:, 0:1]                                # (TB, 1)
    d = x - pivot
    if lane_masked:
        d = jnp.where(valid, d, 0.0)                 # zero out padded lanes
    s = jnp.sum(d, axis=1, keepdims=True)            # (TB, 1)
    sq = jnp.sum(d * d, axis=1, keepdims=True)       # (TB, 1)
    mean_d = s * (1.0 / l_true)                      # mean - pivot
    var = (sq - s * mean_d) * (1.0 / (l_true - 1))   # unbiased (ddof=1)
    var = jnp.maximum(var, 0.0)                      # guard rounding
    std = jnp.sqrt(var)
    # Exact reciprocal: the operand is only (TB, 1), so approx=False is
    # effectively free and matches PyTorch's exact divide.
    inv = pl.reciprocal(std + 1e-5, approx=False)    # (TB, 1)

    # ---- peak detection (vectorized core of scipy.signal.find_peaks) -------
    # A sample is a peak iff it is strictly greater than both neighbors and
    # its height is >= 0.1 * max(spectrum). Endpoints are never peaks.
    # TODO(synk): scipy's `distance=10` and `prominence=0.05*max` filters are
    # sequential greedy algorithms with no clean vectorized Pallas equivalent;
    # only the local-maximum + height criteria are implemented here.
    x_for_max = jnp.where(valid, x, -jnp.inf) if lane_masked else x
    max_int = jnp.max(x_for_max, axis=1, keepdims=True)   # (TB, 1)
    left = pltpu.roll(x, shift=1, axis=1)        # left[i]  = x[i-1]  (wraps)
    right = pltpu.roll(x, shift=Lp - 1, axis=1)  # right[i] = x[i+1]  (wraps)
    interior = (lane > 0) & (lane < l_true - 1)  # kills wrap-around / padding
    is_peak = (x > left) & (x > right) & (x >= 0.1 * max_int) & interior

    # ---- adaptive normalization: weights * (x - mean) / (std + eps) --------
    # (x - mean) == d - mean_d on valid lanes (the pivot cancels).
    weights = jnp.where(is_peak, 1.0 + alpha, 1.0)
    o_ref[...] = (weights * (d - mean_d) * inv).astype(o_ref.dtype)


def _round_up(a, m):
    return (a + m - 1) // m * m


def _vmem_capacity_bytes():
    """Physical VMEM per core; conservative fallback = v7x (64 MiB/TC)."""
    try:
        cap = getattr(pltpu.get_tpu_info(), "vmem_capacity_bytes", None)
        if cap:
            return int(cap)
    except Exception:
        pass
    return 64 << 20


def _choose_batch_tile(B, l_pad, target_block_bytes):
    """Batch tile: multiple of 8, ~target_block_bytes per block, >= ~4 grid
    steps when the batch allows, best-effort even step count (v7x 2-TC split)."""
    if B <= 8:
        return B                       # single block; sublane dim == array dim
    b8 = _round_up(B, 8)
    row_bytes = 4 * l_pad
    tb_cap = max(8, (target_block_bytes // row_bytes) // 8 * 8)
    tb_steps = max(8, _round_up(-(-b8 // 4), 8))    # aim for >= 4 grid steps
    tb = max(8, min(tb_cap, tb_steps))
    steps = -(-B // tb)
    if steps >= 3 and steps % 2 == 1:               # best-effort even split
        tb2 = max(8, _round_up(-(-b8 // (steps + 1)), 8))
        if (-(-B // tb2)) % 2 == 0:
            tb = tb2
    return tb


def adaptive_normalization(x, alpha: float = 0.1):
    """x: (B, 1, L) float32 spectra. Returns (B, 1, L)."""
    B, C, L = x.shape
    assert C == 1, "AdaptiveNormalization expects a single-channel spectrum"
    assert L > 1, "unbiased std needs at least 2 samples along the spectrum"
    x2d = x.reshape(B, L).astype(jnp.float32)

    # Lane-dense spectrum axis: pad L to a multiple of 128 (zeros) only when
    # needed; the true L is passed statically for scales and masks.
    l_pad = _round_up(L, 128)
    lane_masked = l_pad != L
    if lane_masked:
        x2d = jnp.pad(x2d, ((0, 0), (0, l_pad - L)))

    # Generation-aware sizing: ~40% of physical VMEM split across the
    # double-buffered in+out blocks (4 x block bytes), capped at 16 MiB/block.
    # v7x: ~6.4 MiB blocks, ~38 MiB limit (<= 64 MiB/TC).
    # v5e/v6e: ~12.8 MiB blocks, ~77 MiB limit (<= 128 MiB physical).
    vmem_cap = _vmem_capacity_bytes()
    target_block_bytes = int(min(16 << 20, max(2 << 20, (vmem_cap * 2 // 5) // 4)))
    vmem_limit = int(min(96 << 20,
                         max(4 * target_block_bytes + (8 << 20),
                             vmem_cap * 3 // 5)))

    TB = _choose_batch_tile(B, l_pad, target_block_bytes)
    grid = (pl.cdiv(B, TB),)

    out2d = pl.pallas_call(
        functools.partial(_adaptive_norm_kernel, alpha=float(alpha),
                          l_true=int(L), lane_masked=lane_masked),
        out_shape=jax.ShapeDtypeStruct((B, l_pad), jnp.float32),
        grid=grid,
        in_specs=[pl.BlockSpec((TB, l_pad), lambda i: (i, 0))],
        out_specs=pl.BlockSpec((TB, l_pad), lambda i: (i, 0)),
        compiler_params=pltpu.CompilerParams(
            dimension_semantics=("parallel",),
            vmem_limit_bytes=vmem_limit,
        ),
        cost_estimate=pl.CostEstimate(
            flops=12 * B * l_pad,
            transcendentals=2 * B,
            bytes_accessed=8 * B * l_pad,
        ),
    )(x2d)

    if lane_masked:
        out2d = out2d[:, :L]
    return out2d.reshape(B, 1, L)


if __name__ == "__main__":
    key = jax.random.PRNGKey(0)
    B, L = 2, 256  # small spectrum; L is a multiple of 128 for lane alignment

    # Deterministic synthetic spectrum: smooth baseline + a few bumps + noise.
    pos = jnp.arange(L, dtype=jnp.float32)
    k1, k2 = jax.random.split(key)
    noise = 0.02 * jax.random.normal(k1, (B, L), dtype=jnp.float32)
    bumps = (
        1.0 * jnp.exp(-0.5 * ((pos - 40.0) / 3.0) ** 2)
        + 0.7 * jnp.exp(-0.5 * ((pos - 120.0) / 5.0) ** 2)
        + 0.4 * jnp.exp(-0.5 * ((pos - 200.0) / 4.0) ** 2)
    )
    base = 0.1 + 0.05 * jnp.sin(pos / 17.0)
    x = (base[None, :] + bumps[None, :] + noise).reshape(B, 1, L).astype(jnp.float32)

    out = adaptive_normalization(x, alpha=0.1)
    jax.block_until_ready(out)
    assert out.shape == (B, 1, L) and out.dtype == jnp.float32
    assert bool(jnp.all(jnp.isfinite(out)))
    print("KERNEL_OK")
</pallas_src>

<mosaic_0001>
module attributes {stable_mosaic.version = 11 : i64} {
  func.func @_adaptive_norm_kernel(%arg0: i32, %arg1: memref<2x256xf32, #tpu.memory_space<vmem>>, %arg2: memref<2x256xf32, #tpu.memory_space<vmem>>) attributes {dimension_semantics = [#tpu.dimension_semantics<parallel>], iteration_bounds = array<i64: 1>, scalar_prefetch = 0 : i64, scratch_operands = 0 : i64, tpu.core_type = #tpu.core_type<tc>, window_params = [{transform_indices = @transform_0, window_bounds = array<i64: 2, 256>}, {transform_indices = @transform_1, window_bounds = array<i64: 2, 256>}]} {
    %c0 = arith.constant 0 : index
    %c0_0 = arith.constant 0 : index
    %0 = vector.load %arg1[%c0, %c0_0] : memref<2x256xf32, #tpu.memory_space<vmem>>, vector<2x256xf32>
    %1 = tpu.iota {dimensions = array<i32: 1>} : vector<1x256xi32>
    %2 = vector.extract_strided_slice %0 {offsets = [0, 0], sizes = [2, 1], strides = [1, 1]} : vector<2x256xf32> to vector<2x1xf32>
    %3 = vector.broadcast %2 : vector<2x1xf32> to vector<2x256xf32>
    %4 = arith.subf %0, %3 : vector<2x256xf32>
    %cst = arith.constant dense<0.000000e+00> : vector<2xf32>
    %5 = vector.multi_reduction <add>, %4, %cst [1] : vector<2x256xf32> to vector<2xf32>
    %6 = vector.shape_cast %5 : vector<2xf32> to vector<2x1xf32>
    %7 = arith.mulf %4, %4 : vector<2x256xf32>
    %cst_1 = arith.constant dense<0.000000e+00> : vector<2xf32>
    %8 = vector.multi_reduction <add>, %7, %cst_1 [1] : vector<2x256xf32> to vector<2xf32>
    %9 = vector.shape_cast %8 : vector<2xf32> to vector<2x1xf32>
    %cst_2 = arith.constant 3.906250e-03 : f32
    %10 = vector.broadcast %cst_2 : f32 to vector<2x1xf32>
    %11 = arith.mulf %6, %10 : vector<2x1xf32>
    %12 = arith.mulf %6, %11 : vector<2x1xf32>
    %13 = arith.subf %9, %12 : vector<2x1xf32>
    %cst_3 = arith.constant 0.00392156886 : f32
    %14 = vector.broadcast %cst_3 : f32 to vector<2x1xf32>
    %15 = arith.mulf %13, %14 : vector<2x1xf32>
    %cst_4 = arith.constant 0.000000e+00 : f32
    %16 = vector.broadcast %cst_4 : f32 to vector<2x1xf32>
    %17 = arith.maximumf %15, %16 : vector<2x1xf32>
    %18 = math.sqrt %17 : vector<2x1xf32>
    %cst_5 = arith.constant 9.99999974E-6 : f32
    %19 = vector.broadcast %cst_5 : f32 to vector<2x1xf32>
    %20 = arith.addf %18, %19 : vector<2x1xf32>
    %21 = tpu.reciprocal %20 : vector<2x1xf32> -> vector<2x1xf32>
    %cst_6 = arith.constant dense<0xFF800000> : vector<2xf32>
    %22 = vector.multi_reduction <maximumf>, %0, %cst_6 [1] : vector<2x256xf32> to vector<2xf32>
    %23 = vector.shape_cast %22 : vector<2xf32> to vector<2x1xf32>
    %c1_i32 = arith.constant 1 : i32
    %24 = tpu.dynamic_rotate %0 by %c1_i32 dim 1 : vector<2x256xf32>, i32 -> vector<2x256xf32>
    %c255_i32 = arith.constant 255 : i32
    %25 = tpu.dynamic_rotate %0 by %c255_i32 dim 1 : vector<2x256xf32>, i32 -> vector<2x256xf32>
    %c0_i32 = arith.constant 0 : i32
    %26 = vector.broadcast %c0_i32 : i32 to vector<1x256xi32>
    %27 = arith.cmpi sgt, %1, %26 : vector<1x256xi32>
    %c255_i32_7 = arith.constant 255 : i32
    %28 = vector.broadcast %c255_i32_7 : i32 to vector<1x256xi32>
    %29 = arith.cmpi slt, %1, %28 : vector<1x256xi32>
    %30 = arith.andi %27, %29 : vector<1x256xi1>
    %31 = arith.cmpf ogt, %0, %24 : vector<2x256xf32>
    %32 = arith.cmpf ogt, %0, %25 : vector<2x256xf32>
    %33 = arith.andi %31, %32 : vector<2x256xi1>
    %cst_8 = arith.constant 1.000000e-01 : f32
    %34 = vector.broadcast %cst_8 : f32 to vector<2x1xf32>
    %35 = arith.mulf %34, %23 : vector<2x1xf32>
    %36 = vector.broadcast %35 : vector<2x1xf32> to vector<2x256xf32>
    %37 = arith.cmpf oge, %0, %36 : vector<2x256xf32>
    %38 = arith.andi %33, %37 : vector<2x256xi1>
    %39 = vector.broadcast %30 : vector<1x256xi1> to vector<2x256xi1>
    %40 = arith.andi %38, %39 : vector<2x256xi1>
    %cst_9 = arith.constant 1.100000e+00 : f32
    %cst_10 = arith.constant 1.000000e+00 : f32
    %41 = vector.broadcast %cst_9 : f32 to vector<2x256xf32>
    %42 = vector.broadcast %cst_10 : f32 to vector<2x256xf32>
    %43 = arith.select %40, %41, %42 : vector<2x256xi1>, vector<2x256xf32>
    %44 = vector.broadcast %11 : vector<2x1xf32> to vector<2x256xf32>
    %45 = arith.subf %4, %44 : vector<2x256xf32>
    %46 = arith.mulf %43, %45 : vector<2x256xf32>
    %47 = vector.broadcast %21 : vector<2x1xf32> to vector<2x256xf32>
    %48 = arith.mulf %46, %47 : vector<2x256xf32>
    %c0_11 = arith.constant 0 : index
    %c0_12 = arith.constant 0 : index
    %49 = vector.load %arg2[%c0_11, %c0_12] : memref<2x256xf32, #tpu.memory_space<vmem>>, vector<2x256xf32>
    tpu.vector_store %arg2[%c0_11, %c0_12], %48 {strides = array<i32>} : memref<2x256xf32, #tpu.memory_space<vmem>>, vector<2x256xf32>,
    return
  }
  func.func @transform_0(%arg0: i32) -> (i32, i32) {
    %c0_i32 = arith.constant 0 : i32
    %c0_i32_0 = arith.constant 0 : i32
    return %arg0, %c0_i32 : i32, i32
  }
  func.func @transform_1(%arg0: i32) -> (i32, i32) {
    %c0_i32 = arith.constant 0 : i32
    %c0_i32_0 = arith.constant 0 : i32
    return %arg0, %c0_i32 : i32, i32
  }
}

</mosaic_0001>

<llo_original>
// kernel: tpu_custom_call.1
$region0: #{tpu_custom_call.1}
  #allocation0 [shape = 'u32[]', space=smem, size = 0x4, offset = 0x4, fixed_abs, tag = 'smem constant byte address 0x4 - core index']
  #allocation1 [shape = 'u32[144,128]{1,0:T(1,128)}', space=vmem, size = 0x12000, scoped, tag = 'internal scratch']
  %s0 = inlined_call_operand.hbm [shape: f32[2,256], index: 0, kind: input, shape index: {}]
  %s1 = inlined_call_operand.hbm [shape: f32[2,256], index: 1, kind: output, shape index: {}]
  %s2 = sld [smem:[#allocation0]]
  $region18: #{tpu_custom_call.1} parent=0
    _
  %s4 = ssub.s32 1, %s2
  %s5 = scalar_select 0, %s4, %s2
  $region1: #{tpu_custom_call.1} parent=0
    #allocation2 [shape = 'u8[2048]{0}', space=vmem, size = 0x800, scoped, tag = 'input window, operand 0, single buffered']
    #allocation3 [shape = 's32[1]{0}', space=sflag, size = 0x4, scoped, tag = 'scoped memory for tpu_custom_call.1']
    #allocation4 [shape = 's32[1]{0}', space=sflag, size = 0x4, scoped, tag = 'scoped memory for tpu_custom_call.1']
    #allocation5 [shape = 'u8[2048]{0}', space=vmem, size = 0x800, scoped, tag = 'output window, operand 0, single buffered']
    %6 = vsyncpa [#allocation3], 0
    %7 = vsyncpa [#allocation4], 0
    // Predicated region
    $region2: #{tpu_custom_call.1} parent=1 // pred_check
      _
    $region3: #{tpu_custom_call.1} parent=1 // pred_check_branch
      %9 = sbr.rel (0) target = $region5
    $region4: #{tpu_custom_call.1} parent=1 // pred_region
      %s11 = ssub.s32 64, 64
      %12 = vsyncadd [#allocation3], %s11
      %s14 = sshll.u32 [#allocation2], 4
      %s15 = int_to_ptr.vmem [resolvable:$true] %s14
      %17 = dma.hbm_to_vmem [thread:$0]  %s0, 64, %s15, [#allocation3]
    $region5: #{tpu_custom_call.1} parent=1 // pred_fallthru
      _
    // Predicated region
    $region6: #{tpu_custom_call.1} parent=1 // pred_check
      _
    $region7: #{tpu_custom_call.1} parent=1 // pred_check_branch
      %19 = sbr.rel (0) target = $region9
    $region8: #{tpu_custom_call.1} parent=1 // pred_region
      %20 = dma.done [#allocation3], 64
    $region9: #{tpu_custom_call.1} parent=1 // pred_fallthru
      _
    %v21 = vld [vmem:[#allocation2] sm:$0xf]
    %v22 = vlaneseq
    %v23 = vand.u32 %v22, 127
    %v24 = vadd.s32 %v23, 128
    %26 = vset.pattern.permute.xlu0 0
    %27 = vperm.xlu0 %26, %v21
    %v28 = vpop.permute.xlu0 %27
    %v31 = vunpack.c.l.s4 269488144
    %v32 = vunpack.c.0.s8 %v31
    %v33 = vlaneseq
    %v34 = vshrl.u32 %v33, 7
    %v35 = vsub.s32 %v32, %v34
    %v36 = vrot.slane %v28, %v35
    %v37 = vsub.f32 %v21, %v36
    %v40 = vunpack.c.l.s4 1983009808
    %v41 = vunpack.c.0.s8 %v40
    %v42 = vlaneseq
    %v43 = vshrl.u32 %v42, 7
    %v44 = vsub.s32 %v41, %v43
    %v45 = vrot.slane %v37, %v44
    %v46 = vcombine.high %v45, %v45
    %vm49 = vcmask 1041408
    %v50 = vsel %vm49, %v45, 0.0
    %v51 = vsel %vm49, %v46, 0.0
    %v52 = vadd.f32 %v50, %v51
    %53 = vadd.xlane.f32.xlu0 %v52
    %v54 = vpop.xlane.xlu0 %53
    %v55 = vmul.f32 %v37, %v37
    %v58 = vunpack.c.l.s4 1983009808
    %v59 = vunpack.c.0.s8 %v58
    %v60 = vlaneseq
    %v61 = vshrl.u32 %v60, 7
    %v62 = vsub.s32 %v59, %v61
    %v63 = vrot.slane %v55, %v62
    %v64 = vcombine.high %v63, %v63
    %v67 = vsel %vm49, %v63, 0.0
    %v68 = vsel %vm49, %v64, 0.0
    %v69 = vadd.f32 %v67, %v68
    %70 = vadd.xlane.f32.xlu0 %v69
    %v71 = vpop.xlane.xlu0 %70
    %v72 = vmul.f32 %v54, 0.00390625
    %v73 = vmul.f32 %v54, %v72
    %v74 = vsub.f32 %v71, %v73
    %v75 = vmul.f32 %v74, 0.003921569
    %v76 = vmax.f32 %v75, 0.0
    %v77 = vrsqrt.pop %v76
    %v78 = vmul.f32 %v76, %v77
    %vm79 = vcmp.eq.f32.partialorder %v76, inf
    %v80 = vsel %vm79, %v76, %v78
    %vm81 = vcmp.eq.f32.partialorder %v76, 0.0
    %v82 = vand.u32 %v76, 2147483648
    %v83 = vsel %vm81, %v82, %v80
    %v84 = vadd.f32 %v83, 1e-05
    %v85 = vrcp.pop %v84
    %v87 = vunpack.c.l.s4 1983009808
    %v88 = vunpack.c.0.s8 %v87
    %v89 = vlaneseq
    %v90 = vshrl.u32 %v89, 7
    %v91 = vsub.s32 %v88, %v90
    %v92 = vrot.slane %v21, %v91
    %v93 = vcombine.high %v92, %v92
    %v96 = vsel %vm49, %v92, -inf
    %v97 = vsel %vm49, %v93, -inf
    %v98 = vmax.f32 %v96, %v97
    %99 = vmax.xlane.f32.xlu0 %v98
    %v100 = vpop.xlane.xlu0 %99
    %101 = vrot.lane.b32.xlu0 %v92, 1
    %v102 = vpop.permute.xlu0 %101
    %103 = vrot.lane.b32.xlu0 %v93, 1
    %v104 = vpop.permute.xlu0 %103
    %vm105 = vcmp.lt.s32.totalorder %v23, 1
    %v106 = vsel %vm105, %v102, %v104
    %v107 = vsel %vm105, %v104, %v102
    %108 = vrot.lane.b32.xlu0 %v92, 127
    %v109 = vpop.permute.xlu0 %108
    %110 = vrot.lane.b32.xlu0 %v93, 127
    %v111 = vpop.permute.xlu0 %110
    %vm112 = vcmp.lt.s32.totalorder %v23, 127
    %v113 = vsel %vm112, %v109, %v111
    %v114 = vsel %vm112, %v111, %v109
    %vm115 = vcmp.gt.s32.totalorder %v23, 0
    %vm116 = vcmp.gt.s32.totalorder %v24, 0
    %vm117 = vcmp.lt.s32.totalorder %v23, 255
    %vm118 = vcmp.lt.s32.totalorder %v24, 255
    %vm119 = vmand %vm115, %vm117
    %vm120 = vmand %vm116, %vm118
    %v123 = vcombine.low %v107, %v106
    %v125 = vunpack.c.l.s4 1983009808
    %v126 = vunpack.c.0.s8 %v125
    %v127 = vlaneseq
    %v128 = vshrl.u32 %v127, 7
    %v129 = vsub.s32 %v126, %v128
    %v130 = vrot.slane %v123, %v129
    %vm132 = vcmp.gt.f32.partialorder %v21, %v130
    %v135 = vcombine.low %v113, %v114
    %v137 = vunpack.c.l.s4 1983009808
    %v138 = vunpack.c.0.s8 %v137
    %v139 = vlaneseq
    %v140 = vshrl.u32 %v139, 7
    %v141 = vsub.s32 %v138, %v140
    %v142 = vrot.slane %v135, %v141
    %vm144 = vcmp.gt.f32.partialorder %v21, %v142
    %vm145 = vmand %vm132, %vm144
    %v146 = vmul.f32 %v100, 0.1
    %v149 = vunpack.c.l.s4 269488144
    %v150 = vunpack.c.0.s8 %v149
    %v151 = vlaneseq
    %v152 = vshrl.u32 %v151, 7
    %v153 = vsub.s32 %v150, %v152
    %v154 = vrot.slane %v146, %v153
    %vm156 = vcmp.ge.f32.partialorder %v21, %v154
    %vm157 = vmand %vm145, %vm156
    %v158 = vsel %vm119, 1, 0
    %v159 = vsel %vm120, 1, 0
    %vm160 = vcmp.eq.s32.totalorder %v158, 1
    %vm161 = vcmp.eq.s32.totalorder %v159, 1
    %v162 = vsel %vm160, 1, 0
    %v163 = vsel %vm161, 1, 0
    %v164 = vcombine.low %v162, %v163
    %v166 = vunpack.c.l.s4 1983009808
    %v167 = vunpack.c.0.s8 %v166
    %v168 = vlaneseq
    %v169 = vshrl.u32 %v168, 7
    %v170 = vsub.s32 %v167, %v169
    %v171 = vrot.slane %v164, %v170
    %vm172 = vcmp.ne.s32.totalorder %v171, 0
    %vm173 = vmand %vm157, %vm172
    %v174 = vsel %vm173, 1.1, 1.0
    %v177 = vunpack.c.l.s4 269488144
    %v178 = vunpack.c.0.s8 %v177
    %v179 = vlaneseq
    %v180 = vshrl.u32 %v179, 7
    %v181 = vsub.s32 %v178, %v180
    %v182 = vrot.slane %v72, %v181
    %v184 = vsub.f32 %v37, %v182
    %v185 = vmul.f32 %v174, %v184
    %v188 = vunpack.c.l.s4 269488144
    %v189 = vunpack.c.0.s8 %v188
    %v190 = vlaneseq
    %v191 = vshrl.u32 %v190, 7
    %v192 = vsub.s32 %v189, %v191
    %v193 = vrot.slane %v85, %v192
    %v195 = vmul.f32 %v185, %v193
    %196 = vst [vmem:[#allocation5] sm:$0xf] %v195
    // Predicated region
    $region10: #{tpu_custom_call.1} parent=1 // pred_check
      _
    $region11: #{tpu_custom_call.1} parent=1 // pred_check_branch
      %198 = sbr.rel (0) target = $region13
    $region12: #{tpu_custom_call.1} parent=1 // pred_region
      %s200 = ssub.s32 64, 64
      %201 = vsyncadd [#allocation4], %s200
      %s203 = sshll.u32 [#allocation5], 4
      %s204 = int_to_ptr.vmem [resolvable:$true] %s203
      %206 = dma.vmem_to_hbm [thread:$0]  %s204, 64, %s1, [#allocation4]
    $region13: #{tpu_custom_call.1} parent=1 // pred_fallthru
      _
    // Predicated region
    $region14: #{tpu_custom_call.1} parent=1 // pred_check
      _
    $region15: #{tpu_custom_call.1} parent=1 // pred_check_branch
      %208 = sbr.rel (0) target = $region17
    $region16: #{tpu_custom_call.1} parent=1 // pred_region
      %209 = dma.done [#allocation4], 64
    $region17: #{tpu_custom_call.1} parent=1 // pred_fallthru
      _
    %210 = vsyncpa [#allocation3], 1
    %211 = vsyncpa [#allocation4], 1

</llo_original>
